<compile_context>
chip_gen: v5e
topology: v5e:2x2
jax: 0.10.0
libtpu: 0.0.40
codegen_flags: <defaults>
</compile_context>

<pallas_src>
import jax
import jax.numpy as jnp
from jax.experimental import pallas as pl
from jax.experimental.pallas import tpu as pltpu

BETA_MIN = 0.1
BETA_MAX = 20.0


def drift_kernel(scale_ref, x_ref, w1t_ref, bias_ref, w2t_ref, b2_ref, o_ref):
    """One grid step = one (batch b, pixel-tile p) block of shape (C, TP).

    scale_ref : SMEM (1,)           -- precomputed -0.5 * beta_t
    x_ref     : VMEM (1, C, TP)     -- pixels on lanes, channels on sublanes
    w1t_ref   : VMEM (HID, C)       -- W1^T (resident)
    bias_ref  : VMEM (1, HID, 1)    -- this batch's hidden bias (b1 + temb + latent)
    w2t_ref   : VMEM (C, HID)       -- W2^T (resident)
    b2_ref    : VMEM (C, 1)         -- resident
    o_ref     : VMEM (1, C, TP)
    """
    scale = scale_ref[0]                       # -0.5 * beta_t (vec_t = ones(B)*t)
    x = x_ref[0]                               # (C, TP) f32

    # Score-net hot path: two MXU matmuls with pixels on the lane axis.
    h = jnp.dot(w1t_ref[...], x, preferred_element_type=jnp.float32) + bias_ref[0]
    h = jnp.maximum(h, 0.0)
    score = jnp.dot(w2t_ref[...], h, preferred_element_type=jnp.float32) + b2_ref[...]

    # VP-SDE reverse drift: -0.5*beta*x - 0.5*beta*score == scale * (x + score).
    o_ref[0] = scale * (x + score)


def _vmem_plan(channels, hidden):
    """Generation-aware VMEM limit and max pixel-tile size."""
    try:
        info = pltpu.get_tpu_info()
        phys = int(getattr(info, "vmem_capacity_bytes", 64 * 1024 * 1024))
    except Exception:  # no device / older API: assume smallest (v7x-like) VMEM
        phys = 64 * 1024 * 1024
    # Leave 16 MiB headroom for the compiler; never request more than 100 MiB.
    vmem_limit = max(32 * 1024 * 1024, min(phys - 16 * 1024 * 1024,
                                           100 * 1024 * 1024))
    # Bytes per pixel of tile: x + out (double-buffered, 2x each) + h + score.
    per_tp = (2 * 2 * channels + hidden + 2 * channels) * 4
    resident = (2 * hidden * channels + hidden + channels) * 4  # tiny weights/bias
    # Use at most half the scoped limit for the tile math -> pipelining headroom.
    max_tp = (vmem_limit // 2 - resident) // per_tp
    max_tp = max(128, (max_tp // 128) * 128)
    max_tp = min(max_tp, 65536)
    return vmem_limit, max_tp


def _pick_pixel_tile(hw_padded, max_tp):
    """Largest divisor of hw_padded that is a multiple of 128 and <= max_tp."""
    n = hw_padded // 128
    best = 128
    for d in range(1, n + 1):
        if n % d == 0 and d * 128 <= max_tp:
            best = d * 128
    return best


def reverse_drift_pallas(t, x_nchw, params):
    B, C, H, W = x_nchw.shape
    HW = H * W
    hidden = params["w1"].shape[1]

    # NCHW -> (B, C, HW): pure reshape, no HBM transpose pass.
    x = x_nchw.reshape(B, C, HW).astype(jnp.float32)

    # Pad pixel axis to a multiple of 128 so stores stay lane-dense and tiles
    # never exceed the VMEM budget (computation is per-pixel independent).
    hw_pad = ((HW + 127) // 128) * 128
    if hw_pad != HW:
        x = jnp.pad(x, ((0, 0), (0, 0), (0, hw_pad - HW)))

    # vec_t = ones(B) * t  => beta_t identical for every batch element.
    beta_t = BETA_MIN + t * (BETA_MAX - BETA_MIN)
    scale = jnp.asarray(-0.5 * beta_t, jnp.float32).reshape(1)

    # Conditioning glue (tiny linear ops, plain JAX): sinusoidal time embedding
    # + latent projection folded into a per-batch hidden bias.
    temb = jnp.concatenate([jnp.sin(t * params["freqs"]),
                            jnp.cos(t * params["freqs"])])            # (2*F,)
    temb_h = temb @ params["w_t"]                                     # (HID,)
    lat_h = params["latent"] @ params["w_lat"]                        # (B, HID)
    bias = (params["b1"] + temb_h)[None, :] + lat_h                   # (B, HID)
    bias = bias.reshape(B, hidden, 1).astype(jnp.float32)             # broadcast over lanes

    # Pre-transpose tiny weights once so the kernel matmuls put pixels on lanes.
    w1t = params["w1"].T.astype(jnp.float32)                          # (HID, C)
    w2t = params["w2"].T.astype(jnp.float32)                          # (C, HID)
    b2t = params["b2"].reshape(C, 1).astype(jnp.float32)              # (C, 1)

    vmem_limit, max_tp = _vmem_plan(C, hidden)
    TP = _pick_pixel_tile(hw_pad, max_tp)
    # Keep >= 2 grid steps so v7x's 2 TensorCores both get work (cheap no-op on
    # v5e/v6e at these tile sizes).
    if B * (hw_pad // TP) < 2 and hw_pad >= 256:
        TP = _pick_pixel_tile(hw_pad, max(128, TP // 2))
    grid = (B, hw_pad // TP)

    out = pl.pallas_call(
        drift_kernel,
        out_shape=jax.ShapeDtypeStruct((B, C, hw_pad), jnp.float32),
        grid=grid,
        in_specs=[
            pl.BlockSpec(memory_space=pltpu.MemorySpace.SMEM),        # scale (scalar)
            pl.BlockSpec((1, C, TP), lambda b, p: (b, 0, p)),         # x tile
            pl.BlockSpec((hidden, C), lambda b, p: (0, 0)),           # W1^T (resident)
            pl.BlockSpec((1, hidden, 1), lambda b, p: (b, 0, 0)),     # per-batch bias
            pl.BlockSpec((C, hidden), lambda b, p: (0, 0)),           # W2^T (resident)
            pl.BlockSpec((C, 1), lambda b, p: (0, 0)),                # b2   (resident)
        ],
        out_specs=pl.BlockSpec((1, C, TP), lambda b, p: (b, 0, p)),
        compiler_params=pltpu.CompilerParams(
            dimension_semantics=("parallel", "parallel"),             # megacore / v7x 2-TC sharding
            vmem_limit_bytes=int(vmem_limit),
        ),
    )(scale, x, w1t, bias, w2t, b2t)

    # Drop pixel padding, (B, C, HW) -> NCHW (pure reshape).
    return out[:, :, :HW].reshape(B, C, H, W)


def reverse_drift_reference(t, x_nchw, params):
    """Pure-JAX f32 reference mirroring the PyTorch ReverseDrift.forward."""
    B, C, H, W = x_nchw.shape
    x = jnp.transpose(x_nchw, (0, 2, 3, 1)).reshape(B, H * W, C).astype(jnp.float32)

    beta_t = BETA_MIN + t * (BETA_MAX - BETA_MIN)
    sde_drift = -0.5 * beta_t * x
    diffusion_sq = beta_t                                             # sqrt(beta)^2

    temb = jnp.concatenate([jnp.sin(t * params["freqs"]),
                            jnp.cos(t * params["freqs"])])
    temb_h = temb @ params["w_t"]
    lat_h = params["latent"] @ params["w_lat"]
    bias = (params["b1"] + temb_h)[None, None, :] + lat_h[:, None, :]

    h = jnp.maximum(jnp.einsum("bpc,ch->bph", x, params["w1"]) + bias, 0.0)
    score = jnp.einsum("bph,hc->bpc", h, params["w2"]) + params["b2"][None]

    drift = sde_drift - diffusion_sq * score * 0.5
    return jnp.transpose(drift.reshape(B, H, W, C), (0, 3, 1, 2))


def init_params(key, *, channels, hidden, latent_dim, freq_dim, batch):
    ks = jax.random.split(key, 7)
    s = 0.1
    return {
        "w1": (jax.random.normal(ks[0], (channels, hidden), jnp.float32) * s),
        "b1": (jax.random.normal(ks[1], (hidden,), jnp.float32) * s),
        "w2": (jax.random.normal(ks[2], (hidden, channels), jnp.float32) * s),
        "b2": (jax.random.normal(ks[3], (1, channels), jnp.float32) * s),
        "freqs": jnp.exp(jnp.arange(freq_dim, dtype=jnp.float32)),
        "w_t": (jax.random.normal(ks[4], (2 * freq_dim, hidden), jnp.float32) * s),
        "w_lat": (jax.random.normal(ks[5], (latent_dim, hidden), jnp.float32) * s),
        "latent": (jax.random.normal(ks[6], (batch, latent_dim), jnp.float32) * s),
    }


if __name__ == "__main__":
    B, C, H, W = 2, 4, 16, 16
    HIDDEN, LAT, FREQ = 32, 8, 4

    key = jax.random.PRNGKey(0)
    kx, kp = jax.random.split(key)
    x = jax.random.normal(kx, (B, C, H, W), jnp.float32)   # PyTorch NCHW input
    params = init_params(kp, channels=C, hidden=HIDDEN,
                         latent_dim=LAT, freq_dim=FREQ, batch=B)
    t = jnp.float32(0.5)

    out = reverse_drift_pallas(t, x, params)
    out = jax.block_until_ready(out)

    ref = reverse_drift_reference(t, x, params)
    assert out.shape == x.shape and out.dtype == jnp.float32
    assert jnp.allclose(out, ref, atol=1e-4, rtol=1e-4), "mismatch vs JAX reference"

    print("KERNEL_OK")
</pallas_src>

<mosaic_0001>
module attributes {stable_mosaic.version = 11 : i64} {
  func.func @drift_kernel(%arg0: i32, %arg1: i32, %arg2: memref<1xf32, #tpu.memory_space<smem>>, %arg3: memref<1x4x256xf32, #tpu.memory_space<vmem>>, %arg4: memref<32x4xf32, #tpu.memory_space<vmem>>, %arg5: memref<1x32x1xf32, #tpu.memory_space<vmem>>, %arg6: memref<4x32xf32, #tpu.memory_space<vmem>>, %arg7: memref<4x1xf32, #tpu.memory_space<vmem>>, %arg8: memref<1x4x256xf32, #tpu.memory_space<vmem>>) attributes {dimension_semantics = [#tpu.dimension_semantics<parallel>, #tpu.dimension_semantics<parallel>], iteration_bounds = array<i64: 2, 1>, scalar_prefetch = 0 : i64, scratch_operands = 0 : i64, tpu.core_type = #tpu.core_type<tc>, window_params = [{transform_indices = @transform_0, window_bounds = array<i64: 1>}, {transform_indices = @transform_1, window_bounds = array<i64: 1, 4, 256>}, {pipeline_mode = #tpu.pipeline_mode<synchronous>, transform_indices = @transform_2, window_bounds = array<i64: 32, 4>}, {transform_indices = @transform_3, window_bounds = array<i64: 1, 32, 1>}, {pipeline_mode = #tpu.pipeline_mode<synchronous>, transform_indices = @transform_4, window_bounds = array<i64: 4, 32>}, {pipeline_mode = #tpu.pipeline_mode<synchronous>, transform_indices = @transform_5, window_bounds = array<i64: 4, 1>}, {transform_indices = @transform_6, window_bounds = array<i64: 1, 4, 256>}]} {
    %c0 = arith.constant 0 : index
    %0 = memref.load %arg2[%c0] : memref<1xf32, #tpu.memory_space<smem>>
    %c0_0 = arith.constant 0 : index
    %c0_1 = arith.constant 0 : index
    %c0_2 = arith.constant 0 : index
    %1 = vector.load %arg3[%c0_0, %c0_1, %c0_2] : memref<1x4x256xf32, #tpu.memory_space<vmem>>, vector<1x4x256xf32>
    %2 = vector.shape_cast %1 : vector<1x4x256xf32> to vector<4x256xf32>
    %c0_3 = arith.constant 0 : index
    %c0_4 = arith.constant 0 : index
    %3 = vector.load %arg4[%c0_3, %c0_4] : memref<32x4xf32, #tpu.memory_space<vmem>>, vector<32x4xf32>
    %cst = arith.constant dense<0.000000e+00> : vector<32x256xf32>
    %4 = tpu.matmul %3, %2, %cst {dimension_numbers = #tpu.dot_dimension_numbers<[1], [0], [0], [1], [0, 0, 1, 1], [], []>} : vector<32x4xf32>, vector<4x256xf32>, vector<32x256xf32> -> vector<32x256xf32>
    %c0_5 = arith.constant 0 : index
    %c0_6 = arith.constant 0 : index
    %c0_7 = arith.constant 0 : index
    %5 = vector.load %arg5[%c0_5, %c0_6, %c0_7] : memref<1x32x1xf32, #tpu.memory_space<vmem>>, vector<1x32x1xf32>
    %6 = vector.shape_cast %5 : vector<1x32x1xf32> to vector<32x1xf32>
    %7 = vector.broadcast %6 : vector<32x1xf32> to vector<32x256xf32>
    %8 = arith.addf %4, %7 : vector<32x256xf32>
    %cst_8 = arith.constant 0.000000e+00 : f32
    %9 = vector.broadcast %cst_8 : f32 to vector<32x256xf32>
    %10 = arith.maximumf %8, %9 : vector<32x256xf32>
    %c0_9 = arith.constant 0 : index
    %c0_10 = arith.constant 0 : index
    %11 = vector.load %arg6[%c0_9, %c0_10] : memref<4x32xf32, #tpu.memory_space<vmem>>, vector<4x32xf32>
    %cst_11 = arith.constant dense<0.000000e+00> : vector<4x256xf32>
    %12 = tpu.matmul %11, %10, %cst_11 {dimension_numbers = #tpu.dot_dimension_numbers<[1], [0], [0], [1], [0, 0, 1, 1], [], []>} : vector<4x32xf32>, vector<32x256xf32>, vector<4x256xf32> -> vector<4x256xf32>
    %c0_12 = arith.constant 0 : index
    %c0_13 = arith.constant 0 : index
    %13 = vector.load %arg7[%c0_12, %c0_13] : memref<4x1xf32, #tpu.memory_space<vmem>>, vector<4x1xf32>
    %14 = vector.broadcast %13 : vector<4x1xf32> to vector<4x256xf32>
    %15 = arith.addf %12, %14 : vector<4x256xf32>
    %16 = arith.addf %2, %15 : vector<4x256xf32>
    %17 = vector.broadcast %0 : f32 to vector<4x256xf32>
    %18 = arith.mulf %17, %16 : vector<4x256xf32>
    %c0_14 = arith.constant 0 : index
    %c0_15 = arith.constant 0 : index
    %c0_16 = arith.constant 0 : index
    %19 = vector.load %arg8[%c0_14, %c0_15, %c0_16] : memref<1x4x256xf32, #tpu.memory_space<vmem>>, vector<1x4x256xf32>
    %20 = vector.shape_cast %19 : vector<1x4x256xf32> to vector<4x256xf32>
    %21 = vector.shape_cast %18 : vector<4x256xf32> to vector<1x4x256xf32>
    tpu.vector_store %arg8[%c0_14, %c0_15, %c0_16], %21 {strides = array<i32>} : memref<1x4x256xf32, #tpu.memory_space<vmem>>, vector<1x4x256xf32>,
    return
  }
  func.func @transform_0(%arg0: i32, %arg1: i32) -> i32 {
    %c0_i32 = arith.constant 0 : i32
    %c0_i32_0 = arith.constant 0 : i32
    return %c0_i32 : i32
  }
  func.func @transform_1(%arg0: i32, %arg1: i32) -> (i32, i32, i32) {
    %c0_i32 = arith.constant 0 : i32
    %c0_i32_0 = arith.constant 0 : i32
    return %arg0, %c0_i32, %arg1 : i32, i32, i32
  }
  func.func @transform_2(%arg0: i32, %arg1: i32) -> (i32, i32) {
    %c0_i32 = arith.constant 0 : i32
    %c0_i32_0 = arith.constant 0 : i32
    %c0_i32_1 = arith.constant 0 : i32
    return %c0_i32, %c0_i32_0 : i32, i32
  }
  func.func @transform_3(%arg0: i32, %arg1: i32) -> (i32, i32, i32) {
    %c0_i32 = arith.constant 0 : i32
    %c0_i32_0 = arith.constant 0 : i32
    %c0_i32_1 = arith.constant 0 : i32
    return %arg0, %c0_i32, %c0_i32_0 : i32, i32, i32
  }
  func.func @transform_4(%arg0: i32, %arg1: i32) -> (i32, i32) {
    %c0_i32 = arith.constant 0 : i32
    %c0_i32_0 = arith.constant 0 : i32
    %c0_i32_1 = arith.constant 0 : i32
    return %c0_i32, %c0_i32_0 : i32, i32
  }
  func.func @transform_5(%arg0: i32, %arg1: i32) -> (i32, i32) {
    %c0_i32 = arith.constant 0 : i32
    %c0_i32_0 = arith.constant 0 : i32
    %c0_i32_1 = arith.constant 0 : i32
    return %c0_i32, %c0_i32_0 : i32, i32
  }
  func.func @transform_6(%arg0: i32, %arg1: i32) -> (i32, i32, i32) {
    %c0_i32 = arith.constant 0 : i32
    %c0_i32_0 = arith.constant 0 : i32
    return %arg0, %c0_i32, %arg1 : i32, i32, i32
  }
}

</mosaic_0001>

<llo_original>
// kernel: tpu_custom_call.1
$region0: #{tpu_custom_call.1}
  #allocation0 [shape = 'u32[]', space=smem, size = 0x4, offset = 0x4, fixed_abs, tag = 'smem constant byte address 0x4 - core index']
  #allocation1 [shape = 'u32[72,128]{1,0:T(1,128)}', space=vmem, size = 0x9000, scoped, tag = 'internal scratch']
  #allocation2 [shape = 'f32[1]{0:T(128)S(6)}', space=smem, size = 0x200, scoped, tag = 'scoped memory for tpu_custom_call.1']
  %s0 = inlined_call_operand.<no memory space> [shape: f32[1], index: 0, kind: input, shape index: {}]
  %s1 = inlined_call_operand.vmem [shape: f32[2,4,256], index: 1, kind: input, shape index: {}]
  %s2 = inlined_call_operand.vmem [shape: f32[32,4], index: 2, kind: input, shape index: {}]
  %s3 = inlined_call_operand.vmem [shape: f32[2,32,1], index: 3, kind: input, shape index: {}]
  %s4 = inlined_call_operand.vmem [shape: f32[4,32], index: 4, kind: input, shape index: {}]
  %s5 = inlined_call_operand.vmem [shape: f32[4,1], index: 5, kind: input, shape index: {}]
  %s6 = inlined_call_operand.hbm [shape: f32[2,4,256], index: 6, kind: output, shape index: {}]
  %s7 = sld [smem:[#allocation0]]
  $region57: #{tpu_custom_call.1} parent=0
    _
  %s9 = ssub.s32 1, %s7
  %s10 = scalar_select 0, %s9, %s7
  %11 = sst [smem:[#allocation2]] %s0
  $region1: #{tpu_custom_call.1} parent=0
    #allocation3 [shape = 'u8[8192]{0}', space=vmem, size = 0x2000, scoped, tag = 'output window, operand 0']
    #allocation4 [shape = 's32[2]{0}', space=sflag, size = 0x8, scoped, tag = 'scoped memory for tpu_custom_call.1']
    %12 = vsyncpa [#allocation4], 0
    %s13 = scalar_lea.sflag [#allocation4], 1
    %14 = vsyncpa %s13, 0
    loop: start=0, step=1, limit=4
    $region2: #{tpu_custom_call.1} parent=1 // loop_pre_header
      _
    $region3: #{tpu_custom_call.1} parent=1 // loop_header
      %s16 = sphi 0, %s20
      %p17 = scmp.ge.s32.totalorder %s16, 4
      %s23 = sphi 0, %s35
      %s24 = sphi 0, %s31
      %s25 = sphi 0, %s23
      %s26 = sphi 0, %s24
      %s27 = sphi 0, %s25
      %s28 = sphi 0, %s26
      %s36 = sphi 0, %s36
      %s38 = sphi 0, %s36
      %s39 = sphi 0, %s38
      %s53 = sphi 0, %s39
      %s61 = sphi 0, %s63
      %s64 = sphi 0, %s61
      %s65 = sphi 0, %s64
      %s81 = sphi 0, %s65
      %s85 = sphi 0, %s85
      %s87 = sphi 0, %s85
      %s88 = sphi 0, %s87
      %s102 = sphi 0, %s88
      %s108 = sphi 0, %s110
      %s111 = sphi 0, %s108
      %s112 = sphi 0, %s111
      %s128 = sphi 0, %s112
      %s132 = sphi 0, %s132
      %s134 = sphi 0, %s132
      %s135 = sphi 0, %s134
      %s149 = sphi 0, %s135
      %s153 = sphi 0, %s153
      %s155 = sphi 0, %s153
      %s156 = sphi 0, %s155
      %s170 = sphi 0, %s156
      %s178 = sphi 0, %s180
      %s181 = sphi 0, %s178
      %s182 = sphi 0, %s181
      %s198 = sphi 0, %s182
    $region4: #{tpu_custom_call.1} parent=1 // loop_header_branch
      %19 = sbr.rel (%p17) target = $region8
    $region5: #{tpu_custom_call.1} parent=1 // loop_body
      %s21 = ssub.s32 %s16, 1
      %s22 = ssub.s32 %s16, 2
      %s29 = sadd.s32 1, %s24
      %p30 = scmp.ge.s32.totalorder %s29, 1
      %s31 = scalar_select %p30, 0, %s29
      %s32 = sadd.s32 1, %s23
      %s33 = scalar_select %p30, %s32, %s23
      %p34 = scmp.ge.s32.totalorder %s33, 2
      %s35 = scalar_select %p34, 0, %s33
      %s37 = sadd.s32 %s36, 1
      %p40 = scmp.eq.s32.totalorder %s16, 1
      %p41 = scmp.ne.s32.totalorder %s36, %s38
      %p42 = scmp.eq.s32.totalorder %s16, 0
      %p43 = por %p41, %p42
      %p44 = scmp.ne.s32.totalorder %s36, %s38
      %p45 = scmp.eq.s32.totalorder %s21, 1
      %p46 = por %p44, %p45
      %p47 = scmp.ne.s32.totalorder %s38, %s39
      %p48 = scmp.eq.s32.totalorder %s21, 0
      %p49 = por %p47, %p48
      %p50 = scmp.ne.s32.totalorder %s38, %s39
      %p51 = scmp.eq.s32.totalorder %s22, 1
      %p52 = por %p50, %p51
      %p54 = scmp.ne.s32.totalorder %s39, %s53
      %p55 = scmp.eq.s32.totalorder %s22, 0
      %p56 = por %p54, %p55
      %s57 = ssub.s32 %s23, %s35
      %s58 = ssub.s32 %s24, %s31
      %s59 = sor.u32 %s57, %s58
      %p60 = scmp.eq.s32.totalorder %s59, 0
      %s62 = sadd.s32 %s61, 1
      %s63 = scalar_select %p60, %s61, %s62
      %p66 = pneg %p60
      %p67 = scmp.eq.s32.totalorder %s16, 1
      %p68 = por %p66, %p67
      %p69 = scmp.ne.s32.totalorder %s61, %s64
      %p70 = scmp.eq.s32.totalorder %s16, 0
      %p71 = por %p69, %p70
      %p72 = scmp.ne.s32.totalorder %s61, %s64
      %p73 = scmp.eq.s32.totalorder %s21, 1
      %p74 = por %p72, %p73
      %p75 = scmp.ne.s32.totalorder %s64, %s65
      %p76 = scmp.eq.s32.totalorder %s21, 0
      %p77 = por %p75, %p76
      %p78 = scmp.ne.s32.totalorder %s64, %s65
      %p79 = scmp.eq.s32.totalorder %s22, 1
      %p80 = por %p78, %p79
      %p82 = scmp.ne.s32.totalorder %s65, %s81
      %p83 = scmp.eq.s32.totalorder %s22, 0
      %p84 = por %p82, %p83
      %s86 = sadd.s32 %s85, 1
      %p89 = scmp.eq.s32.totalorder %s16, 1
      %p90 = scmp.ne.s32.totalorder %s85, %s87
      %p91 = scmp.eq.s32.totalorder %s16, 0
      %p92 = por %p90, %p91
      %p93 = scmp.ne.s32.totalorder %s85, %s87
      %p94 = scmp.eq.s32.totalorder %s21, 1
      %p95 = por %p93, %p94
      %p96 = scmp.ne.s32.totalorder %s87, %s88
      %p97 = scmp.eq.s32.totalorder %s21, 0
      %p98 = por %p96, %p97
      %p99 = scmp.ne.s32.totalorder %s87, %s88
      %p100 = scmp.eq.s32.totalorder %s22, 1
      %p101 = por %p99, %p100
      %p103 = scmp.ne.s32.totalorder %s88, %s102
      %p104 = scmp.eq.s32.totalorder %s22, 0
      %p105 = por %p103, %p104
      %s106 = ssub.s32 %s23, %s35
      %p107 = scmp.eq.s32.totalorder %s106, 0
      %s109 = sadd.s32 %s108, 1
      %s110 = scalar_select %p107, %s108, %s109
      %p113 = pneg %p107
      %p114 = scmp.eq.s32.totalorder %s16, 1
      %p115 = por %p113, %p114
      %p116 = scmp.ne.s32.totalorder %s108, %s111
      %p117 = scmp.eq.s32.totalorder %s16, 0
      %p118 = por %p116, %p117
      %p119 = scmp.ne.s32.totalorder %s108, %s111
      %p120 = scmp.eq.s32.totalorder %s21, 1
      %p121 = por %p119, %p120
      %p122 = scmp.ne.s32.totalorder %s111, %s112
      %p123 = scmp.eq.s32.totalorder %s21, 0
      %p124 = por %p122, %p123
      %p125 = scmp.ne.s32.totalorder %s111, %s112
      %p126 = scmp.eq.s32.totalorder %s22, 1
      %p127 = por %p125, %p126
      %p129 = scmp.ne.s32.totalorder %s112, %s128
      %p130 = scmp.eq.s32.totalorder %s22, 0
      %p131 = por %p129, %p130
      %s133 = sadd.s32 %s132, 1
      %p136 = scmp.eq.s32.totalorder %s16, 1
      %p137 = scmp.ne.s32.totalorder %s132, %s134
      %p138 = scmp.eq.s32.totalorder %s16, 0
      %p139 = por %p137, %p138
      %p140 = scmp.ne.s32.totalorder %s132, %s134
      %p141 = scmp.eq.s32.totalorder %s21, 1
      %p142 = por %p140, %p141
      %p143 = scmp.ne.s32.totalorder %s134, %s135
      %p144 = scmp.eq.s32.totalorder %s21, 0
      %p145 = por %p143, %p144
      %p146 = scmp.ne.s32.totalorder %s134, %s135
      %p147 = scmp.eq.s32.totalorder %s22, 1
      %p148 = por %p146, %p147
      %p150 = scmp.ne.s32.totalorder %s135, %s149
      %p151 = scmp.eq.s32.totalorder %s22, 0
      %p152 = por %p150, %p151
      %s154 = sadd.s32 %s153, 1
      %p157 = scmp.eq.s32.totalorder %s16, 1
      %p158 = scmp.ne.s32.totalorder %s153, %s155
      %p159 = scmp.eq.s32.totalorder %s16, 0
      %p160 = por %p158, %p159
      %p161 = scmp.ne.s32.totalorder %s153, %s155
      %p162 = scmp.eq.s32.totalorder %s21, 1
      %p163 = por %p161, %p162
      %p164 = scmp.ne.s32.totalorder %s155, %s156
      %p165 = scmp.eq.s32.totalorder %s21, 0
      %p166 = por %p164, %p165
      %p167 = scmp.ne.s32.totalorder %s155, %s156
      %p168 = scmp.eq.s32.totalorder %s22, 1
      %p169 = por %p167, %p168
      %p171 = scmp.ne.s32.totalorder %s156, %s170
      %p172 = scmp.eq.s32.totalorder %s22, 0
      %p173 = por %p171, %p172
      %s174 = ssub.s32 %s23, %s35
      %s175 = ssub.s32 %s24, %s31
      %s176 = sor.u32 %s174, %s175
      %p177 = scmp.eq.s32.totalorder %s176, 0
      %s179 = sadd.s32 %s178, 1
      %s180 = scalar_select %p177, %s178, %s179
      %p183 = pneg %p177
      %p184 = scmp.eq.s32.totalorder %s16, 1
      %p185 = por %p183, %p184
      %p186 = scmp.ne.s32.totalorder %s178, %s181
      %p187 = scmp.eq.s32.totalorder %s16, 0
      %p188 = por %p186, %p187
      %p189 = scmp.ne.s32.totalorder %s178, %s181
      %p190 = scmp.eq.s32.totalorder %s21, 1
      %p191 = por %p189, %p190
      %p192 = scmp.ne.s32.totalorder %s181, %s182
      %p193 = scmp.eq.s32.totalorder %s21, 0
      %p194 = por %p192, %p193
      %p195 = scmp.ne.s32.totalorder %s181, %s182
      %p196 = scmp.eq.s32.totalorder %s22, 1
      %p197 = por %p195, %p196
      %p199 = scmp.ne.s32.totalorder %s182, %s198
      %p200 = scmp.eq.s32.totalorder %s22, 0
      %p201 = por %p199, %p200
      %p202 = scmp.le.s32.totalorder 1, %s16
      %p203 = scmp.lt.s32.totalorder %s16, 3
      %p204 = pnand %p202, %p203
      %p205 = pneg %p204
      // Predicated region
      $region9: #{tpu_custom_call.1} parent=5 // pred_check
        _
      $region10: #{tpu_custom_call.1} parent=5 // pred_check_branch
        %207 = sbr.rel (%p204) target = $region12
      $region11: #{tpu_custom_call.1} parent=5 // pred_region
        %s208 = ssub.s32 %s16, 1
        // Predicated region
        $region13: #{tpu_custom_call.1} parent=11 // pred_check
          %p209 = pneg %p49
        $region14: #{tpu_custom_call.1} parent=11 // pred_check_branch
          %211 = sbr.rel (%p209) target = $region16
        $region15: #{tpu_custom_call.1} parent=11 // pred_region
          _
        $region16: #{tpu_custom_call.1} parent=11 // pred_fallthru
          _
        // Predicated region
        $region17: #{tpu_custom_call.1} parent=11 // pred_check
          %p212 = pneg %p98
        $region18: #{tpu_custom_call.1} parent=11 // pred_check_branch
          %214 = sbr.rel (%p212) target = $region20
        $region19: #{tpu_custom_call.1} parent=11 // pred_region
          _
        $region20: #{tpu_custom_call.1} parent=11 // pred_fallthru
          _
        // Predicated region
        $region21: #{tpu_custom_call.1} parent=11 // pred_check
          %p215 = pneg %p145
        $region22: #{tpu_custom_call.1} parent=11 // pred_check_branch
          %217 = sbr.rel (%p215) target = $region24
        $region23: #{tpu_custom_call.1} parent=11 // pred_region
          _
        $region24: #{tpu_custom_call.1} parent=11 // pred_fallthru
          _
        // Predicated region
        $region25: #{tpu_custom_call.1} parent=11 // pred_check
          %p218 = pneg %p166
        $region26: #{tpu_custom_call.1} parent=11 // pred_check_branch
          %220 = sbr.rel (%p218) target = $region28
        $region27: #{tpu_custom_call.1} parent=11 // pred_region
          _
        $region28: #{tpu_custom_call.1} parent=11 // pred_fallthru
          _
      $region12: #{tpu_custom_call.1} parent=5 // pred_fallthru
        _
      %p221 = scmp.lt.s32.totalorder %s16, 2
      // Predicated region
      $region29: #{tpu_custom_call.1} parent=5 // pred_check
        %p222 = pneg %p221
      $region30: #{tpu_custom_call.1} parent=5 // pred_check_branch
        %224 = sbr.rel (%p222) target = $region32
      $region31: #{tpu_custom_call.1} parent=5 // pred_region
        // Predicated region
        $region33: #{tpu_custom_call.1} parent=31 // pred_check
          %p225 = pneg %p71
        $region34: #{tpu_custom_call.1} parent=31 // pred_check_branch
          %227 = sbr.rel (%p225) target = $region36
        $region35: #{tpu_custom_call.1} parent=31 // pred_region
          %s228 = smul.u32 2, %s24
          %p229 = scmp.lt.s32.totalorder %s23, 1
          %s230 = scalar_select %p229, %s23, 1
          %p231 = scmp.lt.s32.totalorder %s228, 1
          %s232 = scalar_select %p231, %s228, 1
          %s233 = smul.addr %s230, 2
          %s234 = sadd.s32 %s232, %s233
          %s235 = smul.addr %s234, 4
          %s236 = scalar_lea.vmem %s1, %s235
          %s237 = smul.u32 2, %s24
        $region36: #{tpu_custom_call.1} parent=31 // pred_fallthru
          _
        // Predicated region
        $region37: #{tpu_custom_call.1} parent=31 // pred_check
          %p238 = pneg %p118
        $region38: #{tpu_custom_call.1} parent=31 // pred_check_branch
          %240 = sbr.rel (%p238) target = $region40
        $region39: #{tpu_custom_call.1} parent=31 // pred_region
          %p241 = scmp.lt.s32.totalorder %s23, 1
          %s242 = scalar_select %p241, %s23, 1
          %s243 = smul.addr %s242, 4
          %s244 = smul.addr %s243, 8
          %s245 = scalar_lea.vmem %s3, %s244
        $region40: #{tpu_custom_call.1} parent=31 // pred_fallthru
          _
      $region32: #{tpu_custom_call.1} parent=5 // pred_fallthru
        _
      %p246 = scmp.le.s32.totalorder 1, %s16
      %p247 = scmp.lt.s32.totalorder %s16, 3
      %p248 = pnand %p246, %p247
      %p249 = pneg %p248
      // Predicated region
      $region41: #{tpu_custom_call.1} parent=5 // pred_check
        _
      $region42: #{tpu_custom_call.1} parent=5 // pred_check_branch
        %251 = sbr.rel (%p248) target = $region44
      $region43: #{tpu_custom_call.1} parent=5 // pred_region
        %s252 = ssub.s32 %s16, 1
        %p253 = pneg %p49
        %p254 = pneg %p46
        %s255 = smul.u32 2, %s26
        %p256 = scmp.lt.s32.totalorder %s25, 1
        %s257 = scalar_select %p256, %s25, 1
        %p258 = scmp.lt.s32.totalorder %s255, 1
        %s259 = scalar_select %p258, %s255, 1
        %s260 = smul.addr %s257, 2
        %s261 = sadd.s32 %s259, %s260
        %s262 = smul.addr %s261, 4
        %s263 = scalar_lea.vmem %s1, %s262
        %p264 = pneg %p77
        %p265 = pneg %p74
        %p266 = pneg %p98
        %p267 = pneg %p95
        %p268 = scmp.lt.s32.totalorder %s25, 1
        %s269 = scalar_select %p268, %s25, 1
        %s270 = smul.addr %s269, 4
        %s271 = smul.addr %s270, 8
        %s272 = scalar_lea.vmem %s3, %s271
        %p273 = pneg %p124
        %p274 = pneg %p121
        %p275 = pneg %p145
        %p276 = pneg %p142
        %p277 = pneg %p166
        %p278 = pneg %p163
        %p279 = pneg %p194
        %p280 = pneg %p191
        %s281 = sand.u32 %s181, 1
        %s282 = scalar_lea.sflag [#allocation4], %s281
        %s283 = sand.u32 %s181, 1
        %s284 = smul.addr %s283, 8
        %s285 = scalar_lea.vmem [#allocation3], %s284
        %s286 = smul.u32 2, %s26
        %p287 = scmp.lt.s32.totalorder %s25, 1
        %s288 = scalar_select %p287, %s25, 1
        %p289 = scmp.lt.s32.totalorder %s286, 1
        %s290 = scalar_select %p289, %s286, 1
        %s291 = smul.addr %s288, 2
        %s292 = sadd.s32 %s290, %s291
        %s293 = smul.addr %s292, 4
        %s294 = scalar_lea.vmem %s1, %s293
        %s295 = smul.u32 2, %s26
        %p296 = scmp.lt.s32.totalorder %s25, 1
        %s297 = scalar_select %p296, %s25, 1
        %s298 = smul.addr %s297, 4
        %s299 = smul.addr %s298, 8
        %s300 = scalar_lea.vmem %s3, %s299
        %s301 = smul.u32 2, %s26
        %s302 = sld [smem:[#allocation2]]
        %v303 = vld [vmem:[%s294] sm:$0xff]
        %v304 = vld [vmem:[%s2] sm:$0xff]
        %v305 = vld [vmem:[%s2 + $0x8] sm:$0xff]
        %v306 = vld [vmem:[%s2 + $0x10] sm:$0xff]
        %v307 = vld [vmem:[%s2 + $0x18] sm:$0xff]
        %v308 = vld [vmem:[%s300] sm:$0xff]
        %v309 = vld [vmem:[%s300 + $0x8] sm:$0xff]
        %v310 = vld [vmem:[%s300 + $0x10] sm:$0xff]
        %v311 = vld [vmem:[%s300 + $0x18] sm:$0xff]
        %313 = vset.pattern.permute.xlu0 0
        %314 = vperm.xlu0 %313, %v308
        %v315 = vpop.permute.xlu0 %314
        %318 = vset.pattern.permute.xlu0 0
        %319 = vperm.xlu0 %318, %v309
        %v320 = vpop.permute.xlu0 %319
        %323 = vset.pattern.permute.xlu0 0
        %324 = vperm.xlu0 %323, %v310
        %v325 = vpop.permute.xlu0 %324
        %328 = vset.pattern.permute.xlu0 0
        %329 = vperm.xlu0 %328, %v311
        %v330 = vpop.permute.xlu0 %329
        %333 = vst [vmem:[#allocation1] ss:$2 sm:$0xff] %v303
        %v334 = vld.sshfl [vmem:[#allocation1] sm:$0xff pattern:$0x75316420]
        %v335 = vld.sshfl [vmem:[#allocation1 + $0x8] sm:$0xff pattern:$0x75316420]
        %vm336 = vcmask 31744
        %v338 = vsel %vm336, %v304, 0
        %v341 = vsel %vm336, %v305, 0
        %v344 = vsel %vm336, %v306, 0
        %v347 = vsel %vm336, %v307, 0
        %vm349 = vcmask 1043456
        %v350 = vsel %vm349, %v334, 0
        %v352 = vsel %vm349, %v335, 0
        %354 = vmatpush.msra.mxu0 0.0
        %355 = vmatpush.msra.mxu0 0.0
        %356 = vmatpush.msra.mxu0 0.0
        %357 = vmatpush.msra.mxu0 0.0
        %358 = vmatpush.msra.mxu0 0.0
        %359 = vmatpush.msra.mxu0 0.0
        %360 = vmatpush.msra.mxu0 0.0
        %361 = vmatpush.msra.mxu0 0.0
        %362 = vmatpush.msra.mxu0 0.0
        %363 = vmatpush.msra.mxu0 0.0
        %364 = vmatpush.msra.mxu0 0.0
        %365 = vmatpush.msra.mxu0 0.0
        %366 = vmatpush.msra.mxu0 0.0
        %367 = vmatpush.msra.mxu0 0.0
        %368 = vmatpush.msra.mxu0 0.0
        %369 = vmatpush.msra.mxu0 %v350
        %370 = vmatmul.f32.gmra.mxu0 %v338
        %v371 = vpop.f32.mrf.mxu0
        %v372 = vadd.f32 %v315, %v371
        %373 = vmatmul.f32.gmra.mxu0 %v341
        %v374 = vpop.f32.mrf.mxu0
        %v375 = vadd.f32 %v320, %v374
        %376 = vmatmul.f32.gmra.mxu0 %v344
        %v377 = vpop.f32.mrf.mxu0
        %v378 = vadd.f32 %v325, %v377
        %379 = vmatmul.f32.gmra.mxu0 %v347
        %v380 = vpop.f32.mrf.mxu0
        %v381 = vadd.f32 %v330, %v380
        %382 = vdwg.mxu0
        %383 = vmatpush.msra.mxu0 0.0
        %384 = vmatpush.msra.mxu0 0.0
        %385 = vmatpush.msra.mxu0 0.0
        %386 = vmatpush.msra.mxu0 0.0
        %387 = vmatpush.msra.mxu0 0.0
        %388 = vmatpush.msra.mxu0 0.0
        %389 = vmatpush.msra.mxu0 0.0
        %390 = vmatpush.msra.mxu0 0.0
        %391 = vmatpush.msra.mxu0 0.0
        %392 = vmatpush.msra.mxu0 0.0
        %393 = vmatpush.msra.mxu0 0.0
        %394 = vmatpush.msra.mxu0 0.0
        %395 = vmatpush.msra.mxu0 0.0
        %396 = vmatpush.msra.mxu0 0.0
        %397 = vmatpush.msra.mxu0 0.0
        %398 = vmatpush.msra.mxu0 %v352
        %399 = vmatmul.f32.gmra.mxu0 %v338
        %v400 = vpop.f32.mrf.mxu0
        %v401 = vadd.f32 %v315, %v400
        %402 = vmatmul.f32.gmra.mxu0 %v341
        %v403 = vpop.f32.mrf.mxu0
        %v404 = vadd.f32 %v320, %v403
        %405 = vmatmul.f32.gmra.mxu0 %v344
        %v406 = vpop.f32.mrf.mxu0
        %v407 = vadd.f32 %v325, %v406
        %408 = vmatmul.f32.gmra.mxu0 %v347
        %v409 = vpop.f32.mrf.mxu0
        %v410 = vadd.f32 %v330, %v409
        %411 = vdwg.mxu0
        %v412 = vmax.f32 %v372, 0.0
        %v413 = vmax.f32 %v401, 0.0
        %v414 = vmax.f32 %v375, 0.0
        %v415 = vmax.f32 %v404, 0.0
        %v416 = vmax.f32 %v378, 0.0
        %v417 = vmax.f32 %v407, 0.0
        %v418 = vmax.f32 %v381, 0.0
        %v419 = vmax.f32 %v410, 0.0
        %v420 = vld [vmem:[%s4] sm:$0xf]
        %v421 = vld [vmem:[%s5] sm:$0xf]
        %423 = vset.pattern.permute.xlu0 0
        %424 = vperm.xlu0 %423, %v421
        %v425 = vpop.permute.xlu0 %424
        %vm427 = vcmask 261120
        %v429 = vsel %vm427, %v420, 0
        %431 = vmatpush.msra.mxu0 0.0
        %432 = vmatpush.msra.mxu0 0.0
        %433 = vmatpush.msra.mxu0 0.0
        %434 = vmatpush.msra.mxu0 0.0
        %435 = vmatpush.msra.mxu0 0.0
        %436 = vmatpush.msra.mxu0 0.0
        %437 = vmatpush.msra.mxu0 0.0
        %438 = vmatpush.msra.mxu0 0.0
        %439 = vmatpush.msra.mxu0 0.0
        %440 = vmatpush.msra.mxu0 0.0
        %441 = vmatpush.msra.mxu0 0.0
        %442 = vmatpush.msra.mxu0 0.0
        %443 = vmatpush.msra.mxu0 %v418
        %444 = vmatpush.msra.mxu0 %v416
        %445 = vmatpush.msra.mxu0 %v414
        %446 = vmatpush.msra.mxu0 %v412
        %447 = vmatmul.f32.gmra.mxu0 %v429
        %v448 = vpop.f32.mrf.mxu0
        %v449 = vadd.f32 %v425, %v448
        %450 = vdwg.mxu0
        %451 = vmatpush.msra.mxu0 0.0
        %452 = vmatpush.msra.mxu0 0.0
        %453 = vmatpush.msra.mxu0 0.0
        %454 = vmatpush.msra.mxu0 0.0
        %455 = vmatpush.msra.mxu0 0.0
        %456 = vmatpush.msra.mxu0 0.0
        %457 = vmatpush.msra.mxu0 0.0
        %458 = vmatpush.msra.mxu0 0.0
        %459 = vmatpush.msra.mxu0 0.0
        %460 = vmatpush.msra.mxu0 0.0
        %461 = vmatpush.msra.mxu0 0.0
        %462 = vmatpush.msra.mxu0 0.0
        %463 = vmatpush.msra.mxu0 %v419
        %464 = vmatpush.msra.mxu0 %v417
        %465 = vmatpush.msra.mxu0 %v415
        %466 = vmatpush.msra.mxu0 %v413
        %467 = vmatmul.f32.gmra.mxu0 %v429
        %v468 = vpop.f32.mrf.mxu0
        %v469 = vadd.f32 %v425, %v468
        %470 = vdwg.mxu0
        %v473 = vrot.slane %v469, 4
        %v474 = vsel %vm349, %v449, %v473
        %v476 = vadd.f32 %v303, %v474
        %v477 = vstv %s302
        %v478 = vmul.f32 %v477, %v476
        %479 = vst [vmem:[%s285] sm:$0xff] %v478
        %s480 = sand.u32 %s181, 1
        %s481 = scalar_lea.sflag [#allocation4], %s480
        %s482 = sand.u32 %s181, 1
        %s483 = smul.addr %s482, 8
        %s484 = scalar_lea.vmem [#allocation3], %s483
        // Predicated region
        $region45: #{tpu_custom_call.1} parent=43 // pred_check
          %p485 = pneg %p191
        $region46: #{tpu_custom_call.1} parent=43 // pred_check_branch
          %487 = sbr.rel (%p485) target = $region48
        $region47: #{tpu_custom_call.1} parent=43 // pred_region
          %s488 = smul.u32 2, %s26
          %490 = vsyncadd %s481, 0
          %s491 = smul.addr %s25, 2
          %s492 = sadd.s32 %s488, %s491
          %s493 = smul.addr %s492, 4
          %s494 = scalar_lea.hbm %s6, %s493
          %s496 = sshll.u32 %s484, 4
          %s497 = int_to_ptr.vmem [resolvable:$true] %s496
          %s498 = sshll.u32 %s494, 4
          %s499 = int_to_ptr.hbm [resolvable:$true] %s498
          %501 = dma.vmem_to_hbm [thread:$0]  %s497, 128, %s499, %s481
        $region48: #{tpu_custom_call.1} parent=43 // pred_fallthru
          _
      $region44: #{tpu_custom_call.1} parent=5 // pred_fallthru
        _
      %p502 = scmp.le.s32.totalorder 2, %s16
      // Predicated region
      $region49: #{tpu_custom_call.1} parent=5 // pred_check
        %p503 = pneg %p502
      $region50: #{tpu_custom_call.1} parent=5 // pred_check_branch
        %505 = sbr.rel (%p503) target = $region52
      $region51: #{tpu_custom_call.1} parent=5 // pred_region
        %s506 = ssub.s32 %s16, 2
        // Predicated region
        $region53: #{tpu_custom_call.1} parent=51 // pred_check
          %p507 = pneg %p197
        $region54: #{tpu_custom_call.1} parent=51 // pred_check_branch
          %509 = sbr.rel (%p507) target = $region56
        $region55: #{tpu_custom_call.1} parent=51 // pred_region
          %s510 = sand.u32 %s182, 1
          %s511 = scalar_lea.sflag [#allocation4], %s510
          %s512 = sand.u32 %s182, 1
          %s513 = smul.addr %s512, 8
          %s514 = scalar_lea.vmem [#allocation3], %s513
          %516 = dma.done %s511, 128
        $region56: #{tpu_custom_call.1} parent=51 // pred_fallthru
          _
      $region52: #{tpu_custom_call.1} parent=5 // pred_fallthru
        _
    $region6: #{tpu_custom_call.1} parent=1 // loop_footer
      %s20 = sadd.s32 1, %s16
    $region7: #{tpu_custom_call.1} parent=1 // loop_footer_branch
      %15 = sbr.rel target = $region3
    $region8: #{tpu_custom_call.1} parent=1 // loop_exit
      _
    %517 = vsyncpa [#allocation4], 1
    %s518 = scalar_lea.sflag [#allocation4], 1
    %519 = vsyncpa %s518, 1

</llo_original>
